<compile_context>
chip_gen: v7x
topology: tpu7x:2x2x1
jax: 0.10.0
libtpu: 0.0.40
codegen_flags: <defaults>
</compile_context>

<pallas_src>
import functools

import jax
import jax.numpy as jnp
from jax.experimental import pallas as pl
from jax.experimental.pallas import tpu as pltpu


_NUM_SPLITS = 2                     # leading "parallel" grid axis (2 TCs on v7x)
_TARGET_BLOCK_ELEMS = 512 * 1024    # per-input elements per grid step (~2 MiB f32)


def _round_down(x, m):
    return max(m, (x // m) * m)


def _reduce_to_col(x):
    """Sum over every axis except 0, staged as 2-D-friendly reduces -> [B, 1]."""
    while x.ndim > 2:
        x = jnp.sum(x, axis=1)
    return jnp.sum(x, axis=1, keepdims=True)


def _partial_sums_kernel(pred_ref, gt_ref, inter_ref, psum_ref, gsum_ref,
                         *, extent, step, need_mask):
    """Accumulate per-batch (intersection, sum_p, sum_gt) partial sums.

    grid = (split, tile): `split` is "parallel" (one value per TensorCore on
    v7x), `tile` is the "arbitrary" reduction axis over spatial tiles.

    pred_ref / gt_ref        : one spatial tile in its native dtype,
                               [B, TILE_R, 128] (main path) or [B, TILE_HW].
    inter/psum/gsum _ref     : [1, B, 1] f32 partials for this split; resident
                               in VMEM across the whole `tile` axis.
    """
    k = pl.program_id(1)

    @pl.when(k == 0)
    def _():
        inter_ref[...] = jnp.zeros_like(inter_ref)
        psum_ref[...] = jnp.zeros_like(psum_ref)
        gsum_ref[...] = jnp.zeros_like(gsum_ref)

    x = pred_ref[...].astype(jnp.float32)
    p = 0.5 * (jnp.tanh(0.5 * x) + 1.0)        # sigmoid with a single EUP op
    g = gt_ref[...].astype(jnp.float32)

    if need_mask:
        # Global (unclamped) tile id along the tiled axis.  Partial tail tiles
        # and phantom tiles (index_map clamps them to the last real tile) are
        # zeroed here; jnp.where avoids propagating garbage/NaN from OOB reads.
        gtile = pl.program_id(0) * pl.num_programs(1) + k
        idx = gtile * step + jax.lax.broadcasted_iota(jnp.int32, p.shape, 1)
        valid = idx < extent
        p = jnp.where(valid, p, 0.0)
        g = jnp.where(valid, g, 0.0)

    inter_ref[...] += _reduce_to_col(p * g)[None]
    psum_ref[...] += _reduce_to_col(p)[None]
    gsum_ref[...] += _reduce_to_col(g)[None]


@jax.jit
def mask_iou_loss(pred_mask, ground_truth_mask, pred_iou):
    """MaskIoULoss forward.

    pred_mask         : [B, 1, H, W] (any float dtype; streamed in native dtype)
    ground_truth_mask : [B, 1, H, W] or [B, H, W]
    pred_iou          : [B]
    """
    B = pred_mask.shape[0]

    # Channel squeeze + spatial flatten: metadata-only, no HBM copy, no upcast.
    pred = pred_mask[:, 0].reshape(B, -1)
    gt = ground_truth_mask
    if gt.ndim == 4:
        gt = gt[:, 0]
    gt = gt.reshape(B, -1)
    if gt.dtype == jnp.bool_:
        gt = gt.astype(jnp.bfloat16)            # rare: keep kernel loads numeric
    hw = pred.shape[1]

    if hw % 128 == 0:
        # Sublane-filling layout: view as [B, HW//128, 128], tile rows of 128
        # lanes so every (8,128) vreg is fully used even when B < 8.
        n_rows = hw // 128
        tile_r = _TARGET_BLOCK_ELEMS // (B * 128)
        tile_r = n_rows if tile_r >= n_rows else _round_down(tile_r, 8)
        pred_v = pred.reshape(B, n_rows, 128)
        gt_v = gt.reshape(B, n_rows, 128)
        block = (B, tile_r, 128)
        extent, step = n_rows, tile_r
    else:
        # Fallback when H*W is not a multiple of 128: tile the flat lane axis.
        tile_hw = _TARGET_BLOCK_ELEMS // B
        tile_hw = hw if tile_hw >= hw else _round_down(tile_hw, 128)
        pred_v, gt_v = pred, gt
        block = (B, tile_hw)
        extent, step = hw, tile_hw

    n_tiles = pl.cdiv(extent, step)
    steps_per_split = pl.cdiv(n_tiles, _NUM_SPLITS)
    # Mask whenever the grid nominally covers more than `extent` (partial tail
    # tile and/or a phantom tile on the second split).
    need_mask = (_NUM_SPLITS * steps_per_split * step) != extent

    def _tile_idx(c, k):
        # Clamp phantom tiles to the last real tile; the kernel zeroes them.
        return jnp.minimum(c * steps_per_split + k, n_tiles - 1)

    if len(block) == 3:
        in_map = lambda c, k: (0, _tile_idx(c, k), 0)
    else:
        in_map = lambda c, k: (0, _tile_idx(c, k))
    out_map = lambda c, k: (c, 0, 0)

    # VMEM budget: 2x double-buffered native-dtype input blocks + headroom for
    # the in-kernel f32 temporaries.  Block sizing above keeps this within the
    # scoped-VMEM defaults of v5e/v6e/v7x; the explicit limit documents intent
    # and is capped below v7x's 64 MiB physical VMEM.
    block_elems = 1
    for d in block:
        block_elems *= d
    in_bytes = block_elems * (pred.dtype.itemsize + gt.dtype.itemsize)
    vmem_limit = int(min(56 * 2 ** 20,
                         max(32 * 2 ** 20, 2 * in_bytes + 8 * block_elems * 4)))

    part_shape = jax.ShapeDtypeStruct((_NUM_SPLITS, B, 1), jnp.float32)
    part_spec = pl.BlockSpec((1, B, 1), out_map)

    inter_p, psum_p, gsum_p = pl.pallas_call(
        functools.partial(_partial_sums_kernel, extent=extent, step=step,
                          need_mask=need_mask),
        out_shape=(part_shape, part_shape, part_shape),
        grid_spec=pltpu.PrefetchScalarGridSpec(
            num_scalar_prefetch=0,
            grid=(_NUM_SPLITS, steps_per_split),
            in_specs=[pl.BlockSpec(block, in_map),
                      pl.BlockSpec(block, in_map)],
            out_specs=(part_spec, part_spec, part_spec),
        ),
        compiler_params=pltpu.CompilerParams(
            dimension_semantics=("parallel", "arbitrary"),
            vmem_limit_bytes=vmem_limit),
    )(pred_v, gt_v)

    # Scalar epilogue over [NUM_SPLITS, B] partials: negligible next to
    # streaming the masks from HBM; done in plain JAX so the split axis can
    # use both TensorCores of a v7x chip.
    inter = jnp.sum(inter_p, axis=0)[:, 0]               # [B]
    psum = jnp.sum(psum_p, axis=0)[:, 0]
    gsum = jnp.sum(gsum_p, axis=0)[:, 0]
    union = psum + gsum - inter
    iou = (inter + 1e-7) / (union + 1e-7)
    diff = iou - pred_iou.reshape(-1).astype(jnp.float32)
    return jnp.mean(diff * diff)


def _reference(pred_mask, ground_truth_mask, pred_iou):
    p = jax.nn.sigmoid(pred_mask[:, 0].astype(jnp.float32))
    g = ground_truth_mask.astype(jnp.float32)
    if g.ndim == 4:
        g = g[:, 0]
    inter = jnp.sum(p * g, axis=(1, 2))
    union = jnp.sum(p, axis=(1, 2)) + jnp.sum(g, axis=(1, 2)) - inter
    iou = (inter + 1e-7) / (union + 1e-7)
    return jnp.mean((iou - pred_iou.astype(jnp.float32)) ** 2)


if __name__ == "__main__":
    B, H, W = 2, 16, 16
    key = jax.random.PRNGKey(0)
    k1, k2, k3 = jax.random.split(key, 3)

    pred_mask = jax.random.normal(k1, (B, 1, H, W), dtype=jnp.float32)
    ground_truth_mask = (
        jax.random.uniform(k2, (B, 1, H, W)) > 0.5).astype(jnp.float32)
    pred_iou = jax.random.uniform(k3, (B,), dtype=jnp.float32)

    loss = mask_iou_loss(pred_mask, ground_truth_mask, pred_iou)
    loss = jax.block_until_ready(loss)

    ref = _reference(pred_mask, ground_truth_mask, pred_iou)
    assert jnp.allclose(loss, ref, rtol=1e-5, atol=1e-5), (loss, ref)

    print("KERNEL_OK")
</pallas_src>

<mosaic_0001>
module attributes {stable_mosaic.version = 11 : i64} {
  func.func @_partial_sums_kernel(%arg0: i32, %arg1: i32, %arg2: memref<2x2x128xf32, #tpu.memory_space<vmem>>, %arg3: memref<2x2x128xf32, #tpu.memory_space<vmem>>, %arg4: memref<1x2x1xf32, #tpu.memory_space<vmem>>, %arg5: memref<1x2x1xf32, #tpu.memory_space<vmem>>, %arg6: memref<1x2x1xf32, #tpu.memory_space<vmem>>) attributes {dimension_semantics = [#tpu.dimension_semantics<parallel>, #tpu.dimension_semantics<arbitrary>], iteration_bounds = array<i64: 2, 1>, scalar_prefetch = 0 : i64, scratch_operands = 0 : i64, tpu.core_type = #tpu.core_type<tc>, window_params = [{transform_indices = @transform_0, window_bounds = array<i64: 2, 2, 128>}, {transform_indices = @transform_1, window_bounds = array<i64: 2, 2, 128>}, {transform_indices = @transform_2, window_bounds = array<i64: 1, 2, 1>}, {transform_indices = @transform_3, window_bounds = array<i64: 1, 2, 1>}, {transform_indices = @transform_4, window_bounds = array<i64: 1, 2, 1>}]} {
    %c0_i32 = arith.constant 0 : i32
    %0 = arith.cmpi eq, %arg1, %c0_i32 : i32
    %1 = arith.extui %0 : i1 to i32
    %c0_i32_0 = arith.constant 0 : i32
    %2 = arith.cmpi ne, %1, %c0_i32_0 : i32
    scf.if %2 {
      %cst_35 = arith.constant 0.000000e+00 : f32
      %46 = vector.broadcast %cst_35 : f32 to vector<1x2x1xf32>
      %c0_36 = arith.constant 0 : index
      %c0_37 = arith.constant 0 : index
      %c0_38 = arith.constant 0 : index
      %47 = vector.load %arg4[%c0_36, %c0_37, %c0_38] : memref<1x2x1xf32, #tpu.memory_space<vmem>>, vector<1x2x1xf32>
      tpu.vector_store %arg4[%c0_36, %c0_37, %c0_38], %46 {strides = array<i32>} : memref<1x2x1xf32, #tpu.memory_space<vmem>>, vector<1x2x1xf32>,
      %cst_39 = arith.constant 0.000000e+00 : f32
      %48 = vector.broadcast %cst_39 : f32 to vector<1x2x1xf32>
      %c0_40 = arith.constant 0 : index
      %c0_41 = arith.constant 0 : index
      %c0_42 = arith.constant 0 : index
      %49 = vector.load %arg5[%c0_40, %c0_41, %c0_42] : memref<1x2x1xf32, #tpu.memory_space<vmem>>, vector<1x2x1xf32>
      tpu.vector_store %arg5[%c0_40, %c0_41, %c0_42], %48 {strides = array<i32>} : memref<1x2x1xf32, #tpu.memory_space<vmem>>, vector<1x2x1xf32>,
      %cst_43 = arith.constant 0.000000e+00 : f32
      %50 = vector.broadcast %cst_43 : f32 to vector<1x2x1xf32>
      %c0_44 = arith.constant 0 : index
      %c0_45 = arith.constant 0 : index
      %c0_46 = arith.constant 0 : index
      %51 = vector.load %arg6[%c0_44, %c0_45, %c0_46] : memref<1x2x1xf32, #tpu.memory_space<vmem>>, vector<1x2x1xf32>
      tpu.vector_store %arg6[%c0_44, %c0_45, %c0_46], %50 {strides = array<i32>} : memref<1x2x1xf32, #tpu.memory_space<vmem>>, vector<1x2x1xf32>,
    } else {
    }
    %c0 = arith.constant 0 : index
    %c0_1 = arith.constant 0 : index
    %c0_2 = arith.constant 0 : index
    %3 = vector.load %arg2[%c0, %c0_1, %c0_2] : memref<2x2x128xf32, #tpu.memory_space<vmem>>, vector<2x2x128xf32>
    %cst = arith.constant 5.000000e-01 : f32
    %4 = vector.broadcast %cst : f32 to vector<2x2x128xf32>
    %5 = arith.mulf %4, %3 : vector<2x2x128xf32>
    %6 = math.tanh %5 : vector<2x2x128xf32>
    %cst_3 = arith.constant 1.000000e+00 : f32
    %7 = vector.broadcast %cst_3 : f32 to vector<2x2x128xf32>
    %8 = arith.addf %6, %7 : vector<2x2x128xf32>
    %cst_4 = arith.constant 5.000000e-01 : f32
    %9 = vector.broadcast %cst_4 : f32 to vector<2x2x128xf32>
    %10 = arith.mulf %9, %8 : vector<2x2x128xf32>
    %c0_5 = arith.constant 0 : index
    %c0_6 = arith.constant 0 : index
    %c0_7 = arith.constant 0 : index
    %11 = vector.load %arg3[%c0_5, %c0_6, %c0_7] : memref<2x2x128xf32, #tpu.memory_space<vmem>>, vector<2x2x128xf32>
    %c1_i32 = arith.constant 1 : i32
    %12 = arith.muli %arg0, %c1_i32 : i32
    %13 = arith.addi %12, %arg1 : i32
    %c2_i32 = arith.constant 2 : i32
    %14 = arith.muli %13, %c2_i32 : i32
    %15 = tpu.iota {dimensions = array<i32: 1>} : vector<2x2x128xi32>
    %16 = vector.broadcast %14 : i32 to vector<2x2x128xi32>
    %17 = arith.addi %16, %15 : vector<2x2x128xi32>
    %c2_i32_8 = arith.constant 2 : i32
    %18 = vector.broadcast %c2_i32_8 : i32 to vector<2x2x128xi32>
    %19 = arith.cmpi slt, %17, %18 : vector<2x2x128xi32>
    %cst_9 = arith.constant 0.000000e+00 : f32
    %20 = vector.broadcast %cst_9 : f32 to vector<2x2x128xf32>
    %21 = arith.select %19, %10, %20 : vector<2x2x128xi1>, vector<2x2x128xf32>
    %cst_10 = arith.constant 0.000000e+00 : f32
    %22 = vector.broadcast %cst_10 : f32 to vector<2x2x128xf32>
    %23 = arith.select %19, %11, %22 : vector<2x2x128xi1>, vector<2x2x128xf32>
    %c0_11 = arith.constant 0 : index
    %c0_12 = arith.constant 0 : index
    %c0_13 = arith.constant 0 : index
    %24 = vector.load %arg4[%c0_11, %c0_12, %c0_13] : memref<1x2x1xf32, #tpu.memory_space<vmem>>, vector<1x2x1xf32>
    %25 = arith.mulf %21, %23 : vector<2x2x128xf32>
    %cst_14 = arith.constant dense<0.000000e+00> : vector<2x128xf32>
    %26 = vector.multi_reduction <add>, %25, %cst_14 [1] : vector<2x2x128xf32> to vector<2x128xf32>
    %cst_15 = arith.constant dense<0.000000e+00> : vector<2xf32>
    %27 = vector.multi_reduction <add>, %26, %cst_15 [1] : vector<2x128xf32> to vector<2xf32>
    %28 = vector.shape_cast %27 : vector<2xf32> to vector<2x1xf32>
    %29 = vector.shape_cast %28 : vector<2x1xf32> to vector<1x2x1xf32>
    %30 = arith.addf %24, %29 : vector<1x2x1xf32>
    %c0_16 = arith.constant 0 : index
    %c0_17 = arith.constant 0 : index
    %c0_18 = arith.constant 0 : index
    %31 = vector.load %arg4[%c0_16, %c0_17, %c0_18] : memref<1x2x1xf32, #tpu.memory_space<vmem>>, vector<1x2x1xf32>
    tpu.vector_store %arg4[%c0_16, %c0_17, %c0_18], %30 {strides = array<i32>} : memref<1x2x1xf32, #tpu.memory_space<vmem>>, vector<1x2x1xf32>,
    %c0_19 = arith.constant 0 : index
    %c0_20 = arith.constant 0 : index
    %c0_21 = arith.constant 0 : index
    %32 = vector.load %arg5[%c0_19, %c0_20, %c0_21] : memref<1x2x1xf32, #tpu.memory_space<vmem>>, vector<1x2x1xf32>
    %cst_22 = arith.constant dense<0.000000e+00> : vector<2x128xf32>
    %33 = vector.multi_reduction <add>, %21, %cst_22 [1] : vector<2x2x128xf32> to vector<2x128xf32>
    %cst_23 = arith.constant dense<0.000000e+00> : vector<2xf32>
    %34 = vector.multi_reduction <add>, %33, %cst_23 [1] : vector<2x128xf32> to vector<2xf32>
    %35 = vector.shape_cast %34 : vector<2xf32> to vector<2x1xf32>
    %36 = vector.shape_cast %35 : vector<2x1xf32> to vector<1x2x1xf32>
    %37 = arith.addf %32, %36 : vector<1x2x1xf32>
    %c0_24 = arith.constant 0 : index
    %c0_25 = arith.constant 0 : index
    %c0_26 = arith.constant 0 : index
    %38 = vector.load %arg5[%c0_24, %c0_25, %c0_26] : memref<1x2x1xf32, #tpu.memory_space<vmem>>, vector<1x2x1xf32>
    tpu.vector_store %arg5[%c0_24, %c0_25, %c0_26], %37 {strides = array<i32>} : memref<1x2x1xf32, #tpu.memory_space<vmem>>, vector<1x2x1xf32>,
    %c0_27 = arith.constant 0 : index
    %c0_28 = arith.constant 0 : index
    %c0_29 = arith.constant 0 : index
    %39 = vector.load %arg6[%c0_27, %c0_28, %c0_29] : memref<1x2x1xf32, #tpu.memory_space<vmem>>, vector<1x2x1xf32>
    %cst_30 = arith.constant dense<0.000000e+00> : vector<2x128xf32>
    %40 = vector.multi_reduction <add>, %23, %cst_30 [1] : vector<2x2x128xf32> to vector<2x128xf32>
    %cst_31 = arith.constant dense<0.000000e+00> : vector<2xf32>
    %41 = vector.multi_reduction <add>, %40, %cst_31 [1] : vector<2x128xf32> to vector<2xf32>
    %42 = vector.shape_cast %41 : vector<2xf32> to vector<2x1xf32>
    %43 = vector.shape_cast %42 : vector<2x1xf32> to vector<1x2x1xf32>
    %44 = arith.addf %39, %43 : vector<1x2x1xf32>
    %c0_32 = arith.constant 0 : index
    %c0_33 = arith.constant 0 : index
    %c0_34 = arith.constant 0 : index
    %45 = vector.load %arg6[%c0_32, %c0_33, %c0_34] : memref<1x2x1xf32, #tpu.memory_space<vmem>>, vector<1x2x1xf32>
    tpu.vector_store %arg6[%c0_32, %c0_33, %c0_34], %44 {strides = array<i32>} : memref<1x2x1xf32, #tpu.memory_space<vmem>>, vector<1x2x1xf32>,
    return
  }
  func.func @transform_0(%arg0: i32, %arg1: i32) -> (i32, i32, i32) {
    %c1_i32 = arith.constant 1 : i32
    %0 = arith.muli %arg0, %c1_i32 : i32
    %1 = arith.addi %0, %arg1 : i32
    %c0_i32 = arith.constant 0 : i32
    %2 = arith.minsi %1, %c0_i32 : i32
    %c0_i32_0 = arith.constant 0 : i32
    %c0_i32_1 = arith.constant 0 : i32
    %c0_i32_2 = arith.constant 0 : i32
    return %c0_i32_0, %2, %c0_i32_1 : i32, i32, i32
  }
  func.func @transform_1(%arg0: i32, %arg1: i32) -> (i32, i32, i32) {
    %c1_i32 = arith.constant 1 : i32
    %0 = arith.muli %arg0, %c1_i32 : i32
    %1 = arith.addi %0, %arg1 : i32
    %c0_i32 = arith.constant 0 : i32
    %2 = arith.minsi %1, %c0_i32 : i32
    %c0_i32_0 = arith.constant 0 : i32
    %c0_i32_1 = arith.constant 0 : i32
    %c0_i32_2 = arith.constant 0 : i32
    return %c0_i32_0, %2, %c0_i32_1 : i32, i32, i32
  }
  func.func @transform_2(%arg0: i32, %arg1: i32) -> (i32, i32, i32) {
    %c0_i32 = arith.constant 0 : i32
    %c0_i32_0 = arith.constant 0 : i32
    %c0_i32_1 = arith.constant 0 : i32
    return %arg0, %c0_i32, %c0_i32_0 : i32, i32, i32
  }
  func.func @transform_3(%arg0: i32, %arg1: i32) -> (i32, i32, i32) {
    %c0_i32 = arith.constant 0 : i32
    %c0_i32_0 = arith.constant 0 : i32
    %c0_i32_1 = arith.constant 0 : i32
    return %arg0, %c0_i32, %c0_i32_0 : i32, i32, i32
  }
  func.func @transform_4(%arg0: i32, %arg1: i32) -> (i32, i32, i32) {
    %c0_i32 = arith.constant 0 : i32
    %c0_i32_0 = arith.constant 0 : i32
    %c0_i32_1 = arith.constant 0 : i32
    return %arg0, %c0_i32, %c0_i32_0 : i32, i32, i32
  }
}

</mosaic_0001>

<llo_original>
// kernel: squeeze.6
$region0: #{squeeze.6}
  %s0 = inlined_call_operand.vmem [shape: f32[2,1,16,16], index: 0, kind: input, shape index: {}]
  %s1 = inlined_call_operand.vmem [shape: f32[2,2,128], index: 1, kind: output, shape index: {}]
  $region1: #{squeeze.6} parent=0
    #allocation0 [shape = 'u8[8192]{0}', space=vmem, size = 0x2000, scoped, tag = 'scoped mem for output reshape']
    %v2 = vld [vmem:[%s0] ss:$8 sm:$0xf]
    %vm3 = vcmask 130048
    %4 = vst.msk [vmem:[#allocation0] sm:$0x3] %vm3, %v2
    %s5 = scalar_lea.vmem [#allocation0], 6
    %6 = vst.msk [vmem:[%s5] sm:$0xc] %vm3, %v2
    %s7 = scalar_lea.vmem %s0, 7
    %v8 = vld [vmem:[%s7] ss:$8 sm:$0xf]
    %9 = vrot.lane.b32.xlu0 %v8, 112
    %v10 = vpop.permute.xlu0 %9
    %vm11 = vcmask 1048448
    %12 = vst.msk [vmem:[#allocation0] sm:$0x3] %vm11, %v10
    %s13 = scalar_lea.vmem [#allocation0], 6
    %14 = vst.msk [vmem:[%s13] sm:$0xc] %vm11, %v10
    %s15 = scalar_lea.vmem %s0, 6
    %v16 = vld [vmem:[%s15] ss:$8 sm:$0xf]
    %17 = vrot.lane.b32.xlu0 %v16, 96
    %v18 = vpop.permute.xlu0 %17
    %vm19 = vcmask 917248
    %20 = vst.msk [vmem:[#allocation0] sm:$0x3] %vm19, %v18
    %s21 = scalar_lea.vmem [#allocation0], 6
    %22 = vst.msk [vmem:[%s21] sm:$0xc] %vm19, %v18
    %s23 = scalar_lea.vmem %s0, 5
    %v24 = vld [vmem:[%s23] ss:$8 sm:$0xf]
    %25 = vrot.lane.b32.xlu0 %v24, 80
    %v26 = vpop.permute.xlu0 %25
    %vm27 = vcmask 786048
    %28 = vst.msk [vmem:[#allocation0] sm:$0x3] %vm27, %v26
    %s29 = scalar_lea.vmem [#allocation0], 6
    %30 = vst.msk [vmem:[%s29] sm:$0xc] %vm27, %v26
    %s31 = scalar_lea.vmem %s0, 4
    %v32 = vld [vmem:[%s31] ss:$8 sm:$0xf]
    %33 = vrot.lane.b32.xlu0 %v32, 64
    %v34 = vpop.permute.xlu0 %33
    %vm35 = vcmask 654848
    %36 = vst.msk [vmem:[#allocation0] sm:$0x3] %vm35, %v34
    %s37 = scalar_lea.vmem [#allocation0], 6
    %38 = vst.msk [vmem:[%s37] sm:$0xc] %vm35, %v34
    %s39 = scalar_lea.vmem %s0, 3
    %v40 = vld [vmem:[%s39] ss:$8 sm:$0xf]
    %41 = vrot.lane.b32.xlu0 %v40, 48
    %v42 = vpop.permute.xlu0 %41
    %vm43 = vcmask 523648
    %44 = vst.msk [vmem:[#allocation0] sm:$0x3] %vm43, %v42
    %s45 = scalar_lea.vmem [#allocation0], 6
    %46 = vst.msk [vmem:[%s45] sm:$0xc] %vm43, %v42
    %s47 = scalar_lea.vmem %s0, 2
    %v48 = vld [vmem:[%s47] ss:$8 sm:$0xf]
    %49 = vrot.lane.b32.xlu0 %v48, 32
    %v50 = vpop.permute.xlu0 %49
    %vm51 = vcmask 392448
    %52 = vst.msk [vmem:[#allocation0] sm:$0x3] %vm51, %v50
    %s53 = scalar_lea.vmem [#allocation0], 6
    %54 = vst.msk [vmem:[%s53] sm:$0xc] %vm51, %v50
    %s55 = scalar_lea.vmem %s0, 1
    %v56 = vld [vmem:[%s55] ss:$8 sm:$0xf]
    %57 = vrot.lane.b32.xlu0 %v56, 16
    %v58 = vpop.permute.xlu0 %57
    %vm59 = vcmask 261248
    %60 = vst.msk [vmem:[#allocation0] sm:$0x3] %vm59, %v58
    %s61 = scalar_lea.vmem [#allocation0], 6
    %62 = vst.msk [vmem:[%s61] sm:$0xc] %vm59, %v58
    %s64 = sshllo.u32 0, 2
    %v66 = vld [vmem:[#allocation0] sm:%s64]
    %s67 = sshllo.u32 0, 2
    %68 = vst [vmem:[%s1] sm:%s67] %v66
    %s69 = scalar_lea.vmem [#allocation0], 8
    %v70 = vld [vmem:[%s69] sm:%s64]
    %s71 = sshllo.u32 0, 2
    %s72 = scalar_lea.vmem %s1, 2
    %73 = vst [vmem:[%s72] sm:%s71] %v70

// kernel: squeeze.5
$region0: #{squeeze.5}
  %s0 = inlined_call_operand.hbm [shape: f32[2,1,16,16], index: 0, kind: input, shape index: {}]
  %s1 = inlined_call_operand.vmem [shape: f32[2,2,128], index: 1, kind: output, shape index: {}]
  $region1: #{squeeze.5} parent=0
    #allocation0 [shape = 'u8[16384]{0}', space=vmem, size = 0x4000, scoped, tag = 'operand span for operand 0']
    #allocation1 [shape = 's32[1]{0}', space=sflag, size = 0x4, scoped, tag = 'scoped memory for squeeze.5']
    #allocation2 [shape = 'u8[8192]{0}', space=vmem, size = 0x2000, scoped, tag = 'scoped mem for output reshape']
    %2 = vsyncpa [#allocation1], 0
    %s4 = ssub.s32 512, 512
    %5 = vsyncadd [#allocation1], %s4
    %s7 = sshll.u32 [#allocation0], 4
    %s8 = int_to_ptr.vmem [resolvable:$true] %s7
    %10 = dma.hbm_to_vmem [thread:$0]  %s0, 512, %s8, [#allocation1]
    %11 = dma.done [#allocation1], 512
    %v12 = vld [vmem:[#allocation0] ss:$8 sm:$0xf]
    %vm13 = vcmask 130048
    %14 = vst.msk [vmem:[#allocation2] sm:$0x3] %vm13, %v12
    %s15 = scalar_lea.vmem [#allocation2], 6
    %16 = vst.msk [vmem:[%s15] sm:$0xc] %vm13, %v12
    %s17 = scalar_lea.vmem [#allocation0], 7
    %v18 = vld [vmem:[%s17] ss:$8 sm:$0xf]
    %19 = vrot.lane.b32.xlu0 %v18, 112
    %v20 = vpop.permute.xlu0 %19
    %vm21 = vcmask 1048448
    %22 = vst.msk [vmem:[#allocation2] sm:$0x3] %vm21, %v20
    %s23 = scalar_lea.vmem [#allocation2], 6
    %24 = vst.msk [vmem:[%s23] sm:$0xc] %vm21, %v20
    %s25 = scalar_lea.vmem [#allocation0], 6
    %v26 = vld [vmem:[%s25] ss:$8 sm:$0xf]
    %27 = vrot.lane.b32.xlu0 %v26, 96
    %v28 = vpop.permute.xlu0 %27
    %vm29 = vcmask 917248
    %30 = vst.msk [vmem:[#allocation2] sm:$0x3] %vm29, %v28
    %s31 = scalar_lea.vmem [#allocation2], 6
    %32 = vst.msk [vmem:[%s31] sm:$0xc] %vm29, %v28
    %s33 = scalar_lea.vmem [#allocation0], 5
    %v34 = vld [vmem:[%s33] ss:$8 sm:$0xf]
    %35 = vrot.lane.b32.xlu0 %v34, 80
    %v36 = vpop.permute.xlu0 %35
    %vm37 = vcmask 786048
    %38 = vst.msk [vmem:[#allocation2] sm:$0x3] %vm37, %v36
    %s39 = scalar_lea.vmem [#allocation2], 6
    %40 = vst.msk [vmem:[%s39] sm:$0xc] %vm37, %v36
    %s41 = scalar_lea.vmem [#allocation0], 4
    %v42 = vld [vmem:[%s41] ss:$8 sm:$0xf]
    %43 = vrot.lane.b32.xlu0 %v42, 64
    %v44 = vpop.permute.xlu0 %43
    %vm45 = vcmask 654848
    %46 = vst.msk [vmem:[#allocation2] sm:$0x3] %vm45, %v44
    %s47 = scalar_lea.vmem [#allocation2], 6
    %48 = vst.msk [vmem:[%s47] sm:$0xc] %vm45, %v44
    %s49 = scalar_lea.vmem [#allocation0], 3
    %v50 = vld [vmem:[%s49] ss:$8 sm:$0xf]
    %51 = vrot.lane.b32.xlu0 %v50, 48
    %v52 = vpop.permute.xlu0 %51
    %vm53 = vcmask 523648
    %54 = vst.msk [vmem:[#allocation2] sm:$0x3] %vm53, %v52
    %s55 = scalar_lea.vmem [#allocation2], 6
    %56 = vst.msk [vmem:[%s55] sm:$0xc] %vm53, %v52
    %s57 = scalar_lea.vmem [#allocation0], 2
    %v58 = vld [vmem:[%s57] ss:$8 sm:$0xf]
    %59 = vrot.lane.b32.xlu0 %v58, 32
    %v60 = vpop.permute.xlu0 %59
    %vm61 = vcmask 392448
    %62 = vst.msk [vmem:[#allocation2] sm:$0x3] %vm61, %v60
    %s63 = scalar_lea.vmem [#allocation2], 6
    %64 = vst.msk [vmem:[%s63] sm:$0xc] %vm61, %v60
    %s65 = scalar_lea.vmem [#allocation0], 1
    %v66 = vld [vmem:[%s65] ss:$8 sm:$0xf]
    %67 = vrot.lane.b32.xlu0 %v66, 16
    %v68 = vpop.permute.xlu0 %67
    %vm69 = vcmask 261248
    %70 = vst.msk [vmem:[#allocation2] sm:$0x3] %vm69, %v68
    %s71 = scalar_lea.vmem [#allocation2], 6
    %72 = vst.msk [vmem:[%s71] sm:$0xc] %vm69, %v68
    %s74 = sshllo.u32 0, 2
    %v76 = vld [vmem:[#allocation2] sm:%s74]
    %s77 = sshllo.u32 0, 2
    %78 = vst [vmem:[%s1] sm:%s77] %v76
    %s79 = scalar_lea.vmem [#allocation2], 8
    %v80 = vld [vmem:[%s79] sm:%s74]
    %s81 = sshllo.u32 0, 2
    %s82 = scalar_lea.vmem %s1, 2
    %83 = vst [vmem:[%s82] sm:%s81] %v80
    %84 = vsyncpa [#allocation1], 1

// kernel: mask_iou_loss.1
$region0: #{mask_iou_loss.1}
  #allocation0 [shape = 'u32[]', space=smem, size = 0x4, offset = 0x4, fixed_abs, tag = 'smem constant byte address 0x4 - core index']
  #allocation1 [shape = 'u32[144,128]{1,0:T(1,128)}', space=vmem, size = 0x12000, scoped, tag = 'internal scratch']
  %s0 = inlined_call_operand.vmem [shape: f32[2,2,128], index: 0, kind: input, shape index: {}]
  %s1 = inlined_call_operand.vmem [shape: f32[2,2,128], index: 1, kind: input, shape index: {}]
  %s2 = inlined_call_operand.vmem [shape: f32[2,2,1], index: 2, kind: output, shape index: {0}]
  %s3 = inlined_call_operand.vmem [shape: f32[2,2,1], index: 3, kind: output, shape index: {1}]
  %s4 = inlined_call_operand.vmem [shape: f32[2,2,1], index: 4, kind: output, shape index: {2}]
  %5 = xla_tuple %s2, %s3, %s4
  %s6 = sld [smem:[#allocation0]]
  $region61: #{mask_iou_loss.1} parent=0
    _
  %s8 = ssub.s32 1, %s6
  %s9 = scalar_select 0, %s8, %s6
  loop: start=0, step=1, limit=4
  $region2: #{mask_iou_loss.1} parent=0 // loop_pre_header
    _
  $region3: #{mask_iou_loss.1} parent=0 // loop_header
    %s11 = sphi 0, %s15
    %p12 = scmp.ge.s32.totalorder %s11, 4
    %s18 = sphi 0, %s30
    %s19 = sphi 0, %s26
    %s20 = sphi 0, %s18
    %s21 = sphi 0, %s19
    %s22 = sphi 0, %s20
    %s23 = sphi 0, %s21
    %s39 = sphi 0, %s41
    %s42 = sphi 0, %s39
    %s43 = sphi 0, %s42
    %s59 = sphi 0, %s43
    %s71 = sphi 0, %s73
    %s74 = sphi 0, %s71
    %s75 = sphi 0, %s74
    %s91 = sphi 0, %s75
    %s97 = sphi 0, %s99
    %s100 = sphi 0, %s97
    %s101 = sphi 0, %s100
    %s117 = sphi 0, %s101
    %s123 = sphi 0, %s125
    %s126 = sphi 0, %s123
    %s127 = sphi 0, %s126
    %s143 = sphi 0, %s127
    %s149 = sphi 0, %s151
    %s152 = sphi 0, %s149
    %s153 = sphi 0, %s152
    %s169 = sphi 0, %s153
  $region4: #{mask_iou_loss.1} parent=0 // loop_header_branch
    %14 = sbr.rel (%p12) target = $region8
  $region5: #{mask_iou_loss.1} parent=0 // loop_body
    %s16 = ssub.s32 %s11, 1
    %s17 = ssub.s32 %s11, 2
    %s24 = sadd.s32 1, %s19
    %p25 = scmp.ge.s32.totalorder %s24, 1
    %s26 = scalar_select %p25, 0, %s24
    %s27 = sadd.s32 1, %s18
    %s28 = scalar_select %p25, %s27, %s18
    %p29 = scmp.ge.s32.totalorder %s28, 2
    %s30 = scalar_select %p29, 0, %s28
    %s31 = sadd.s32 %s18, %s19
    %p32 = scmp.lt.s32.totalorder %s31, 0
    %s33 = scalar_select %p32, %s31, 0
    %s34 = sadd.s32 %s30, %s26
    %p35 = scmp.lt.s32.totalorder %s34, 0
    %s36 = scalar_select %p35, %s34, 0
    %s37 = ssub.s32 %s33, %s36
    %p38 = scmp.eq.s32.totalorder %s37, 0
    %s40 = sadd.s32 %s39, 1
    %s41 = scalar_select %p38, %s39, %s40
    %p44 = pneg %p38
    %p45 = scmp.eq.s32.totalorder %s11, 1
    %p46 = por %p44, %p45
    %p47 = scmp.ne.s32.totalorder %s39, %s42
    %p48 = scmp.eq.s32.totalorder %s11, 0
    %p49 = por %p47, %p48
    %p50 = scmp.ne.s32.totalorder %s39, %s42
    %p51 = scmp.eq.s32.totalorder %s16, 1
    %p52 = por %p50, %p51
    %p53 = scmp.ne.s32.totalorder %s42, %s43
    %p54 = scmp.eq.s32.totalorder %s16, 0
    %p55 = por %p53, %p54
    %p56 = scmp.ne.s32.totalorder %s42, %s43
    %p57 = scmp.eq.s32.totalorder %s17, 1
    %p58 = por %p56, %p57
    %p60 = scmp.ne.s32.totalorder %s43, %s59
    %p61 = scmp.eq.s32.totalorder %s17, 0
    %p62 = por %p60, %p61
    %s63 = sadd.s32 %s18, %s19
    %p64 = scmp.lt.s32.totalorder %s63, 0
    %s65 = scalar_select %p64, %s63, 0
    %s66 = sadd.s32 %s30, %s26
    %p67 = scmp.lt.s32.totalorder %s66, 0
    %s68 = scalar_select %p67, %s66, 0
    %s69 = ssub.s32 %s65, %s68
    %p70 = scmp.eq.s32.totalorder %s69, 0
    %s72 = sadd.s32 %s71, 1
    %s73 = scalar_select %p70, %s71, %s72
    %p76 = pneg %p70
    %p77 = scmp.eq.s32.totalorder %s11, 1
    %p78 = por %p76, %p77
    %p79 = scmp.ne.s32.totalorder %s71, %s74
    %p80 = scmp.eq.s32.totalorder %s11, 0
    %p81 = por %p79, %p80
    %p82 = scmp.ne.s32.totalorder %s71, %s74
    %p83 = scmp.eq.s32.totalorder %s16, 1
    %p84 = por %p82, %p83
    %p85 = scmp.ne.s32.totalorder %s74, %s75
    %p86 = scmp.eq.s32.totalorder %s16, 0
    %p87 = por %p85, %p86
    %p88 = scmp.ne.s32.totalorder %s74, %s75
    %p89 = scmp.eq.s32.totalorder %s17, 1
    %p90 = por %p88, %p89
    %p92 = scmp.ne.s32.totalorder %s75, %s91
    %p93 = scmp.eq.s32.totalorder %s17, 0
    %p94 = por %p92, %p93
    %s95 = ssub.s32 %s18, %s30
    %p96 = scmp.eq.s32.totalorder %s95, 0
    %s98 = sadd.s32 %s97, 1
    %s99 = scalar_select %p96, %s97, %s98
    %p102 = pneg %p96
    %p103 = scmp.eq.s32.totalorder %s11, 1
    %p104 = por %p102, %p103
    %p105 = scmp.ne.s32.totalorder %s97, %s100
    %p106 = scmp.eq.s32.totalorder %s11, 0
    %p107 = por %p105, %p106
    %p108 = scmp.ne.s32.totalorder %s97, %s100
    %p109 = scmp.eq.s32.totalorder %s16, 1
    %p110 = por %p108, %p109
    %p111 = scmp.ne.s32.totalorder %s100, %s101
    %p112 = scmp.eq.s32.totalorder %s16, 0
    %p113 = por %p111, %p112
    %p114 = scmp.ne.s32.totalorder %s100, %s101
    %p115 = scmp.eq.s32.totalorder %s17, 1
    %p116 = por %p114, %p115
    %p118 = scmp.ne.s32.totalorder %s101, %s117
    %p119 = scmp.eq.s32.totalorder %s17, 0
    %p120 = por %p118, %p119
    %s121 = ssub.s32 %s18, %s30
    %p122 = scmp.eq.s32.totalorder %s121, 0
    %s124 = sadd.s32 %s123, 1
    %s125 = scalar_select %p122, %s123, %s124
    %p128 = pneg %p122
    %p129 = scmp.eq.s32.totalorder %s11, 1
    %p130 = por %p128, %p129
    %p131 = scmp.ne.s32.totalorder %s123, %s126
    %p132 = scmp.eq.s32.totalorder %s11, 0
    %p133 = por %p131, %p132
    %p134 = scmp.ne.s32.totalorder %s123, %s126
    %p135 = scmp.eq.s32.totalorder %s16, 1
    %p136 = por %p134, %p135
    %p137 = scmp.ne.s32.totalorder %s126, %s127
    %p138 = scmp.eq.s32.totalorder %s16, 0
    %p139 = por %p137, %p138
    %p140 = scmp.ne.s32.totalorder %s126, %s127
    %p141 = scmp.eq.s32.totalorder %s17, 1
    %p142 = por %p140, %p141
    %p144 = scmp.ne.s32.totalorder %s127, %s143
    %p145 = scmp.eq.s32.totalorder %s17, 0
    %p146 = por %p144, %p145
    %s147 = ssub.s32 %s18, %s30
    %p148 = scmp.eq.s32.totalorder %s147, 0
    %s150 = sadd.s32 %s149, 1
    %s151 = scalar_select %p148, %s149, %s150
    %p154 = pneg %p148
    %p155 = scmp.eq.s32.totalorder %s11, 1
    %p156 = por %p154, %p155
    %p157 = scmp.ne.s32.totalorder %s149, %s152
    %p158 = scmp.eq.s32.totalorder %s11, 0
    %p159 = por %p157, %p158
    %p160 = scmp.ne.s32.totalorder %s149, %s152
    %p161 = scmp.eq.s32.totalorder %s16, 1
    %p162 = por %p160, %p161
    %p163 = scmp.ne.s32.totalorder %s152, %s153
    %p164 = scmp.eq.s32.totalorder %s16, 0
    %p165 = por %p163, %p164
    %p166 = scmp.ne.s32.totalorder %s152, %s153
    %p167 = scmp.eq.s32.totalorder %s17, 1
    %p168 = por %p166, %p167
    %p170 = scmp.ne.s32.totalorder %s153, %s169
    %p171 = scmp.eq.s32.totalorder %s17, 0
    %p172 = por %p170, %p171
    %p173 = scmp.le.s32.totalorder 1, %s11
    %p174 = scmp.lt.s32.totalorder %s11, 3
    %p175 = pnand %p173, %p174
    %p176 = pneg %p175
    // Predicated region
    $region9: #{mask_iou_loss.1} parent=5 // pred_check
      _
    $region10: #{mask_iou_loss.1} parent=5 // pred_check_branch
      %178 = sbr.rel (%p175) target = $region12
    $region11: #{mask_iou_loss.1} parent=5 // pred_region
      %s179 = ssub.s32 %s11, 1
    $region12: #{mask_iou_loss.1} parent=5 // pred_fallthru
      _
    %p180 = scmp.lt.s32.totalorder %s11, 2
    // Predicated region
    $region13: #{mask_iou_loss.1} parent=5 // pred_check
      %p181 = pneg %p180
    $region14: #{mask_iou_loss.1} parent=5 // pred_check_branch
      %183 = sbr.rel (%p181) target = $region16
    $region15: #{mask_iou_loss.1} parent=5 // pred_region
      // Predicated region
      $region17: #{mask_iou_loss.1} parent=15 // pred_check
        %p184 = pneg %p49
      $region18: #{mask_iou_loss.1} parent=15 // pred_check_branch
        %186 = sbr.rel (%p184) target = $region20
      $region19: #{mask_iou_loss.1} parent=15 // pred_region
        %s187 = sadd.s32 %s18, %s19
        %p188 = scmp.lt.s32.totalorder %s187, 0
        %s189 = scalar_select %p188, %s187, 0
        %p190 = scmp.lt.s32.totalorder %s189, 0
        %s191 = scalar_select %p190, %s189, 0
        %s192 = smul.addr %s191, 2
        %s193 = scalar_lea.vmem %s0, %s192
        %s194 = sadd.s32 %s18, %s19
        %p195 = scmp.lt.s32.totalorder %s194, 0
        %s196 = scalar_select %p195, %s194, 0
      $region20: #{mask_iou_loss.1} parent=15 // pred_fallthru
        _
      // Predicated region
      $region21: #{mask_iou_loss.1} parent=15 // pred_check
        %p197 = pneg %p81
      $region22: #{mask_iou_loss.1} parent=15 // pred_check_branch
        %199 = sbr.rel (%p197) target = $region24
      $region23: #{mask_iou_loss.1} parent=15 // pred_region
        %s200 = sadd.s32 %s18, %s19
        %p201 = scmp.lt.s32.totalorder %s200, 0
        %s202 = scalar_select %p201, %s200, 0
        %p203 = scmp.lt.s32.totalorder %s202, 0
        %s204 = scalar_select %p203, %s202, 0
        %s205 = smul.addr %s204, 2
        %s206 = scalar_lea.vmem %s1, %s205
        %s207 = sadd.s32 %s18, %s19
        %p208 = scmp.lt.s32.totalorder %s207, 0
        %s209 = scalar_select %p208, %s207, 0
      $region24: #{mask_iou_loss.1} parent=15 // pred_fallthru
        _
    $region16: #{mask_iou_loss.1} parent=5 // pred_fallthru
      _
    %p210 = scmp.le.s32.totalorder 1, %s11
    %p211 = scmp.lt.s32.totalorder %s11, 3
    %p212 = pnand %p210, %p211
    %p213 = pneg %p212
    // Predicated region
    $region25: #{mask_iou_loss.1} parent=5 // pred_check
      _
    $region26: #{mask_iou_loss.1} parent=5 // pred_check_branch
      %215 = sbr.rel (%p212) target = $region28
    $region27: #{mask_iou_loss.1} parent=5 // pred_region
      %s216 = ssub.s32 %s11, 1
      %s217 = sadd.s32 %s20, %s21
      %p218 = scmp.lt.s32.totalorder %s217, 0
      %s219 = scalar_select %p218, %s217, 0
      %p220 = scmp.lt.s32.totalorder %s219, 0
      %s221 = scalar_select %p220, %s219, 0
      %s222 = smul.addr %s221, 2
      %s223 = scalar_lea.vmem %s0, %s222
      %p224 = pneg %p55
      %p225 = pneg %p52
      %s226 = sadd.s32 %s20, %s21
      %p227 = scmp.lt.s32.totalorder %s226, 0
      %s228 = scalar_select %p227, %s226, 0
      %p229 = scmp.lt.s32.totalorder %s228, 0
      %s230 = scalar_select %p229, %s228, 0
      %s231 = smul.addr %s230, 2
      %s232 = scalar_lea.vmem %s1, %s231
      %p233 = pneg %p87
      %p234 = pneg %p84
      %p235 = pneg %p113
      %p236 = pneg %p110
      %p237 = scmp.lt.s32.totalorder %s20, 1
      %s238 = scalar_select %p237, %s20, 1
      %s239 = smul.addr %s238, 2
      %s240 = scalar_lea.vmem %s2, %s239
      %p241 = pneg %p139
      %p242 = pneg %p136
      %p243 = scmp.lt.s32.totalorder %s20, 1
      %s244 = scalar_select %p243, %s20, 1
      %s245 = smul.addr %s244, 2
      %s246 = scalar_lea.vmem %s3, %s245
      %p247 = pneg %p165
      %p248 = pneg %p162
      %p249 = scmp.lt.s32.totalorder %s20, 1
      %s250 = scalar_select %p249, %s20, 1
      %s251 = smul.addr %s250, 2
      %s252 = scalar_lea.vmem %s4, %s251
      %s253 = sadd.s32 %s20, %s21
      %p254 = scmp.lt.s32.totalorder %s253, 0
      %s255 = scalar_select %p254, %s253, 0
      %p256 = scmp.lt.s32.totalorder %s255, 0
      %s257 = scalar_select %p256, %s255, 0
      %s258 = smul.addr %s257, 2
      %s259 = scalar_lea.vmem %s0, %s258
      %s260 = sadd.s32 %s20, %s21
      %p261 = scmp.lt.s32.totalorder %s260, 0
      %s262 = scalar_select %p261, %s260, 0
      %s263 = sadd.s32 %s20, %s21
      %p264 = scmp.lt.s32.totalorder %s263, 0
      %s265 = scalar_select %p264, %s263, 0
      %p266 = scmp.lt.s32.totalorder %s265, 0
      %s267 = scalar_select %p266, %s265, 0
      %s268 = smul.addr %s267, 2
      %s269 = scalar_lea.vmem %s1, %s268
      %s270 = sadd.s32 %s20, %s21
      %p271 = scmp.lt.s32.totalorder %s270, 0
      %s272 = scalar_select %p271, %s270, 0
      %p273 = scmp.lt.s32.totalorder %s20, 1
      %s274 = scalar_select %p273, %s20, 1
      %s275 = smul.addr %s274, 2
      %s276 = scalar_lea.vmem %s2, %s275
      %p277 = scmp.lt.s32.totalorder %s20, 1
      %s278 = scalar_select %p277, %s20, 1
      %s279 = smul.addr %s278, 2
      %s280 = scalar_lea.vmem %s3, %s279
      %p281 = scmp.lt.s32.totalorder %s20, 1
      %s282 = scalar_select %p281, %s20, 1
      %s283 = smul.addr %s282, 2
      %s284 = scalar_lea.vmem %s4, %s283
      %p285 = scmp.eq.s32.totalorder %s21, 0
      // Predicated region
      $region29: #{mask_iou_loss.1} parent=27 // pred_check
        %p286 = pneg %p285
      $region30: #{mask_iou_loss.1} parent=27 // pred_check_branch
        %288 = sbr.rel (%p286) target = $region32
      $region31: #{mask_iou_loss.1} parent=27 // pred_region
        %vm289 = vcmask 1024
        %290 = vst.msk [vmem:[%s276] sm:$0x3] %vm289, 0.0
        %291 = vst.msk [vmem:[%s280] sm:$0x3] %vm289, 0.0
        %292 = vst.msk [vmem:[%s284] sm:$0x3] %vm289, 0.0
      $region32: #{mask_iou_loss.1} parent=27 // pred_fallthru
        _
      %v293 = vld [vmem:[%s259] sm:$0x3]
      %v294 = vld [vmem:[%s259 + $0x2] sm:$0x3]
      %v295 = vmul.f32 %v293, 0.5
      %v296 = vmul.f32 %v294, 0.5
      %v297 = vtanh.pop %v295
      %v298 = vtanh.pop %v296
      %v299 = vadd.f32 %v297, 1.0
      %v300 = vadd.f32 %v298, 1.0
      %v301 = vmul.f32 %v299, 0.5
      %v302 = vmul.f32 %v300, 0.5
      %v303 = vld [vmem:[%s269] sm:$0x3]
      %v304 = vld [vmem:[%s269 + $0x2] sm:$0x3]
      %s305 = sadd.s32 %s20, %s21
      %s306 = smul.u32 %s305, 2
      %v307 = vlaneseq
      %v308 = vshrl.u32 %v307, 7
      %v309 = vstv %s306
      %v310 = vadd.s32 %v309, %v308
      %vm311 = vcmp.lt.s32.totalorder %v310, 2
      %v312 = vsel %vm311, %v301, 0.0
      %v313 = vsel %vm311, %v302, 0.0
      %v314 = vsel %vm311, %v303, 0.0
      %v315 = vsel %vm311, %v304, 0.0
      %v316 = vld [vmem:[%s276] sm:$0x3]
      %v317 = vmul.f32 %v312, %v314
      %v318 = vmul.f32 %v313, %v315
      %vm319 = vcmask 1041408
      %v320 = vsel %vm319, %v317, 0.0
      %v321 = vrot.slane %v320, 4
      %v322 = vadd.f32 %v320, %v321
      %v323 = vrot.slane %v322, 2
      %v324 = vadd.f32 %v322, %v323
      %v325 = vrot.slane %v324, 1
      %v326 = vadd.f32 %v324, %v325
      %v327 = vsel %vm319, %v318, 0.0
      %v328 = vrot.slane %v327, 4
      %v329 = vadd.f32 %v327, %v328
      %v330 = vrot.slane %v329, 2
      %v331 = vadd.f32 %v329, %v330
      %v332 = vrot.slane %v331, 1
      %v333 = vadd.f32 %v331, %v332
      %vm336 = vcmask 1041409
      %v337 = vsel %vm336, %v333, %v326
      %v339 = vsel %vm319, %v337, 0.0
      %340 = vadd.xlane.f32.xlu0 %v339
      %v341 = vpop.xlane.xlu0 %340
      %v342 = vadd.f32 %v316, %v341
      %vm343 = vcmask 1024
      %344 = vst.msk [vmem:[%s276] sm:$0x3] %vm343, %v342
      %v345 = vld [vmem:[%s280] sm:$0x3]
      %v346 = vsel %vm319, %v312, 0.0
      %v347 = vrot.slane %v346, 4
      %v348 = vadd.f32 %v346, %v347
      %v349 = vrot.slane %v348, 2
      %v350 = vadd.f32 %v348, %v349
      %v351 = vrot.slane %v350, 1
      %v352 = vadd.f32 %v350, %v351
      %v353 = vsel %vm319, %v313, 0.0
      %v354 = vrot.slane %v353, 4
      %v355 = vadd.f32 %v353, %v354
      %v356 = vrot.slane %v355, 2
      %v357 = vadd.f32 %v355, %v356
      %v358 = vrot.slane %v357, 1
      %v359 = vadd.f32 %v357, %v358
      %v362 = vsel %vm336, %v359, %v352
      %v364 = vsel %vm319, %v362, 0.0
      %365 = vadd.xlane.f32.xlu0 %v364
      %v366 = vpop.xlane.xlu0 %365
      %v367 = vadd.f32 %v345, %v366
      %368 = vst.msk [vmem:[%s280] sm:$0x3] %vm343, %v367
      %v369 = vld [vmem:[%s284] sm:$0x3]
      %v370 = vsel %vm319, %v314, 0.0
      %v371 = vrot.slane %v370, 4
      %v372 = vadd.f32 %v370, %v371
      %v373 = vrot.slane %v372, 2
      %v374 = vadd.f32 %v372, %v373
      %v375 = vrot.slane %v374, 1
      %v376 = vadd.f32 %v374, %v375
      %v377 = vsel %vm319, %v315, 0.0
      %v378 = vrot.slane %v377, 4
      %v379 = vadd.f32 %v377, %v378
      %v380 = vrot.slane %v379, 2
      %v381 = vadd.f32 %v379, %v380
      %v382 = vrot.slane %v381, 1
      %v383 = vadd.f32 %v381, %v382
      %v386 = vsel %vm336, %v383, %v376
      %v388 = vsel %vm319, %v386, 0.0
      %389 = vadd.xlane.f32.xlu0 %v388
      %v390 = vpop.xlane.xlu0 %389
      %v391 = vadd.f32 %v369, %v390
      %392 = vst.msk [vmem:[%s284] sm:$0x3] %vm343, %v391
      %p393 = scmp.lt.s32.totalorder %s20, 1
      %s394 = scalar_select %p393, %s20, 1
      %s395 = smul.addr %s394, 2
      %s396 = scalar_lea.vmem %s2, %s395
      %p397 = scmp.lt.s32.totalorder %s20, 1
      %s398 = scalar_select %p397, %s20, 1
      %s399 = smul.addr %s398, 2
      %s400 = scalar_lea.vmem %s3, %s399
      %p401 = scmp.lt.s32.totalorder %s20, 1
      %s402 = scalar_select %p401, %s20, 1
      %s403 = smul.addr %s402, 2
      %s404 = scalar_lea.vmem %s4, %s403
      // Predicated region
      $region33: #{mask_iou_loss.1} parent=27 // pred_check
        %p405 = pneg %p110
      $region34: #{mask_iou_loss.1} parent=27 // pred_check_branch
        %407 = sbr.rel (%p405) target = $region36
      $region35: #{mask_iou_loss.1} parent=27 // pred_region
        _
      $region36: #{mask_iou_loss.1} parent=27 // pred_fallthru
        _
      // Predicated region
      $region37: #{mask_iou_loss.1} parent=27 // pred_check
        %p408 = pneg %p136
      $region38: #{mask_iou_loss.1} parent=27 // pred_check_branch
        %410 = sbr.rel (%p408) target = $region40
      $region39: #{mask_iou_loss.1} parent=27 // pred_region
        _
      $region40: #{mask_iou_loss.1} parent=27 // pred_fallthru
        _
      // Predicated region
      $region41: #{mask_iou_loss.1} parent=27 // pred_check
        %p411 = pneg %p162
      $region42: #{mask_iou_loss.1} parent=27 // pred_check_branch
        %413 = sbr.rel (%p411) target = $region44
      $region43: #{mask_iou_loss.1} parent=27 // pred_region
        _
      $region44: #{mask_iou_loss.1} parent=27 // pred_fallthru
        _
    $region28: #{mask_iou_loss.1} parent=5 // pred_fallthru
      _
    %p414 = scmp.le.s32.totalorder 2, %s11
    // Predicated region
    $region45: #{mask_iou_loss.1} parent=5 // pred_check
      %p415 = pneg %p414
    $region46: #{mask_iou_loss.1} parent=5 // pred_check_branch
      %417 = sbr.rel (%p415) target = $region48
    $region47: #{mask_iou_loss.1} parent=5 // pred_region
      %s418 = ssub.s32 %s11, 2
      // Predicated region
      $region49: #{mask_iou_loss.1} parent=47 // pred_check
        %p419 = pneg %p116
      $region50: #{mask_iou_loss.1} parent=47 // pred_check_branch
        %421 = sbr.rel (%p419) target = $region52
      $region51: #{mask_iou_loss.1} parent=47 // pred_region
        %p422 = scmp.lt.s32.totalorder %s22, 1
        %s423 = scalar_select %p422, %s22, 1
        %s424 = smul.addr %s423, 2
        %s425 = scalar_lea.vmem %s2, %s424
      $region52: #{mask_iou_loss.1} parent=47 // pred_fallthru
        _
      // Predicated region
      $region53: #{mask_iou_loss.1} parent=47 // pred_check
        %p426 = pneg %p142
      $region54: #{mask_iou_loss.1} parent=47 // pred_check_branch
        %428 = sbr.rel (%p426) target = $region56
      $region55: #{mask_iou_loss.1} parent=47 // pred_region
        %p429 = scmp.lt.s32.totalorder %s22, 1
        %s430 = scalar_select %p429, %s22, 1
        %s431 = smul.addr %s430, 2
        %s432 = scalar_lea.vmem %s3, %s431
      $region56: #{mask_iou_loss.1} parent=47 // pred_fallthru
        _
      // Predicated region
      $region57: #{mask_iou_loss.1} parent=47 // pred_check
        %p433 = pneg %p168
      $region58: #{mask_iou_loss.1} parent=47 // pred_check_branch
        %435 = sbr.rel (%p433) target = $region60
      $region59: #{mask_iou_loss.1} parent=47 // pred_region
        %p436 = scmp.lt.s32.totalorder %s22, 1
        %s437 = scalar_select %p436, %s22, 1
        %s438 = smul.addr %s437, 2
        %s439 = scalar_lea.vmem %s4, %s438
      $region60: #{mask_iou_loss.1} parent=47 // pred_fallthru
        _
    $region48: #{mask_iou_loss.1} parent=5 // pred_fallthru
      _
  $region6: #{mask_iou_loss.1} parent=0 // loop_footer
    %s15 = sadd.s32 1, %s11
  $region7: #{mask_iou_loss.1} parent=0 // loop_footer_branch
    %10 = sbr.rel target = $region3
  $region8: #{mask_iou_loss.1} parent=0 // loop_exit
    _

</llo_original>
